<compile_context>
chip_gen: v6e
topology: v6e:2x2x1
jax: 0.10.0
libtpu: 0.0.40
codegen_flags: <defaults>
</compile_context>

<pallas_src>
import functools

import numpy as np
import jax
import jax.numpy as jnp
from jax import lax
from jax.experimental import pallas as pl
from jax.experimental.pallas import tpu as pltpu

_EPS = 1e-6
_HALO_ROWS = 8                       # halo blocks are sublane-aligned 8-row slabs
_TARGET_BLOCK_BYTES = 2 * 1024 * 1024


def _cdiv(a, b):
    return -(-a // b)


def _grad_kernel(*refs, tr, h, w, has_halo, mask_rows):
    """One (PB, TR, W) tile of the gradient magnitude.

    refs = (x, top_halo, bot_halo, out) when has_halo else (x, out).
    Rows sit on sublanes, W on lanes.  Vertical neighbours are sublane-shifted
    slices (+ one halo row); horizontal neighbours are lane-shifted slices with
    an explicit zero border column.
    """
    if has_halo:
        x_ref, top_ref, bot_ref, o_ref = refs
    else:
        x_ref, o_ref = refs

    row0 = pl.program_id(1) * tr
    x = x_ref[...].astype(jnp.float32)              # (PB, TR, W)

    if mask_rows:
        # Partial last row tile: rows >= H act as the zero padding below the image.
        r_idx = lax.broadcasted_iota(jnp.int32, x.shape, 1)
        x = jnp.where(r_idx + row0 < h, x, 0.0)

    if has_halo:
        top = top_ref[:, _HALO_ROWS - 1:_HALO_ROWS, :].astype(jnp.float32)  # row row0-1
        bot = bot_ref[:, 0:1, :].astype(jnp.float32)                        # row row0+tr
        top = jnp.where(row0 > 0, top, 0.0)          # zero pad above the image
        bot = jnp.where(row0 + tr < h, bot, 0.0)     # zero pad below the image
    else:
        top = jnp.zeros_like(x[:, :1, :])
        bot = jnp.zeros_like(x[:, :1, :])

    # v[r] = x[r+1] - x[r-1]  (sublane shifts, halo rows at the tile edges)
    x_up = jnp.concatenate([top, x[:, : tr - 1, :]], axis=1)
    x_dn = jnp.concatenate([x[:, 1:, :], bot], axis=1)
    v = x_dn - x_up

    # h[c] = x[c+1] - x[c-1]  (lane shifts, zero column at the image border)
    zcol = jnp.zeros_like(x[:, :, :1])
    x_lf = jnp.concatenate([zcol, x[:, :, : w - 1]], axis=2)
    x_rt = jnp.concatenate([x[:, :, 1:], zcol], axis=2)
    hg = x_rt - x_lf

    o_ref[...] = jnp.sqrt(v * v + hg * hg + _EPS).astype(o_ref.dtype)


def get_gradient(x, *, plane_tile=None, row_tile=None):
    """Pallas TPU equivalent of Get_gradient.forward.  x: (N, C>=3, H, W)."""
    N, C, H, W = x.shape
    if C < 3:
        raise ValueError("Get_gradient uses channels 0, 1, 2")
    if C > 3:
        x = x[:, :3]
    NC = N * 3
    xr = x.reshape(NC, H, W)                 # collapses leading dims: layout no-op
    itemsize = jnp.dtype(x.dtype).itemsize

    # ---- row tiling (sublane axis). TR is a multiple of 8, or the full H. ----
    # TODO(synk): add lane-axis (W) tiling with column halos for images so wide
    # that even an 8-row slab exceeds the VMEM budget.
    if row_tile is not None:
        tr = int(row_tile)
    elif H * W * itemsize <= _TARGET_BLOCK_BYTES:
        tr = H
    else:
        tr = max(8, (_TARGET_BLOCK_BYTES // (W * itemsize)) // 8 * 8)
    tr = min(tr, H)
    if tr < H and tr % 8 != 0:
        raise ValueError("row_tile must be a multiple of 8 when smaller than H")
    n_row = _cdiv(H, tr)
    has_halo = n_row > 1

    # ---- planes per block: keep blocks ~_TARGET_BLOCK_BYTES and give the
    # parallel grid >= 2 steps so both v7x TensorCores are fed. ----
    if plane_tile is not None:
        pb = int(plane_tile)
    else:
        pb = max(1, _TARGET_BLOCK_BYTES // max(1, tr * W * itemsize))
        if n_row == 1 and NC >= 2:
            pb = min(pb, _cdiv(NC, 2))
    pb = max(1, min(pb, NC))
    n_plane = _cdiv(NC, pb)

    x_spec = pl.BlockSpec((pb, tr, W), lambda p, i: (p, i, 0))
    out_spec = pl.BlockSpec((pb, tr, W), lambda p, i: (p, i, 0))
    in_specs = [x_spec]
    operands = [xr]
    if has_halo:
        trb = tr // _HALO_ROWS                 # row tile measured in 8-row blocks
        n_hb = _cdiv(H, _HALO_ROWS)
        top_spec = pl.BlockSpec(
            (pb, _HALO_ROWS, W),
            lambda p, i: (p, jnp.maximum(i * trb - 1, 0), 0))
        bot_spec = pl.BlockSpec(
            (pb, _HALO_ROWS, W),
            lambda p, i: (p, jnp.minimum((i + 1) * trb, n_hb - 1), 0))
        in_specs += [top_spec, bot_spec]
        operands += [xr, xr]                   # halo rows read from the same array

    block_bytes = pb * tr * W * 4
    nelem = NC * H * W
    cost = pl.CostEstimate(
        flops=8 * nelem,
        transcendentals=nelem,
        bytes_accessed=2 * nelem * itemsize)
    # (x + 2 small halos + out) double-buffered plus shifted temporaries;
    # capped well below v7x's 64 MiB physical VMEM.
    vmem_limit = int(min(48 * 1024 * 1024, max(32 * 1024 * 1024, 10 * block_bytes)))

    kernel = functools.partial(
        _grad_kernel, tr=tr, h=H, w=W, has_halo=has_halo,
        mask_rows=(H % tr) != 0)

    out = pl.pallas_call(
        kernel,
        grid=(n_plane, n_row),
        in_specs=in_specs,
        out_specs=out_spec,
        out_shape=jax.ShapeDtypeStruct((NC, H, W), x.dtype),
        compiler_params=pltpu.CompilerParams(
            dimension_semantics=("parallel", "parallel"),
            vmem_limit_bytes=vmem_limit),
        cost_estimate=cost,
    )(*operands)

    return out.reshape(N, 3, H, W)


if __name__ == "__main__":
    key = jax.random.PRNGKey(0)
    k1, k2, k3 = jax.random.split(key, 3)

    def reference(x):
        x = x[:, :3].astype(jnp.float32)
        xp = jnp.pad(x, ((0, 0), (0, 0), (1, 1), (1, 1)))
        v = xp[:, :, 2:, 1:-1] - xp[:, :, :-2, 1:-1]
        h = xp[:, :, 1:-1, 2:] - xp[:, :, 1:-1, :-2]
        return jnp.sqrt(v * v + h * h + 1e-6)

    run = jax.jit(get_gradient, static_argnames=("plane_tile", "row_tile"))

    # 1) Default tiling (full-plane rows, planes batched per block).
    x1 = jax.random.normal(k1, (2, 3, 16, 16), jnp.float32)
    o1 = jax.block_until_ready(run(x1))
    assert o1.shape == (2, 3, 16, 16), o1.shape
    assert o1.dtype == jnp.float32, o1.dtype
    np.testing.assert_allclose(np.asarray(o1), np.asarray(reference(x1)),
                               rtol=1e-6, atol=1e-6)

    # 2) Forced row tiling -> exercises the halo path (plus a partial plane block).
    x2 = jax.random.normal(k2, (1, 3, 24, 20), jnp.float32)
    o2 = jax.block_until_ready(run(x2, row_tile=8, plane_tile=2))
    np.testing.assert_allclose(np.asarray(o2), np.asarray(reference(x2)),
                               rtol=1e-6, atol=1e-6)

    # 3) Odd H -> partial last row tile + in-kernel row masking.
    x3 = jax.random.normal(k3, (1, 3, 13, 20), jnp.float32)
    o3 = jax.block_until_ready(run(x3, row_tile=8, plane_tile=1))
    np.testing.assert_allclose(np.asarray(o3), np.asarray(reference(x3)),
                               rtol=1e-6, atol=1e-6)

    print("KERNEL_OK")
</pallas_src>

<mosaic_0001>
module attributes {stable_mosaic.version = 11 : i64} {
  func.func @_grad_kernel(%arg0: i32, %arg1: i32, %arg2: memref<3x16x16xf32, #tpu.memory_space<vmem>>, %arg3: memref<3x16x16xf32, #tpu.memory_space<vmem>>) attributes {dimension_semantics = [#tpu.dimension_semantics<parallel>, #tpu.dimension_semantics<parallel>], iteration_bounds = array<i64: 2, 1>, scalar_prefetch = 0 : i64, scratch_operands = 0 : i64, tpu.core_type = #tpu.core_type<tc>, window_params = [{transform_indices = @transform_0, window_bounds = array<i64: 3, 16, 16>}, {transform_indices = @transform_1, window_bounds = array<i64: 3, 16, 16>}]} {
    %c0 = arith.constant 0 : index
    %c0_0 = arith.constant 0 : index
    %c0_1 = arith.constant 0 : index
    %0 = vector.load %arg2[%c0, %c0_0, %c0_1] : memref<3x16x16xf32, #tpu.memory_space<vmem>>, vector<3x16x16xf32>
    %cst = arith.constant 0.000000e+00 : f32
    %1 = vector.broadcast %cst : f32 to vector<3x1x16xf32>
    %cst_2 = arith.constant 0.000000e+00 : f32
    %2 = vector.broadcast %cst_2 : f32 to vector<3x1x16xf32>
    %3 = vector.extract_strided_slice %0 {offsets = [0, 0, 0], sizes = [3, 15, 16], strides = [1, 1, 1]} : vector<3x16x16xf32> to vector<3x15x16xf32>
    %4 = tpu.concatenate %1, %3 in 1 : vector<3x1x16xf32>, vector<3x15x16xf32> -> vector<3x16x16xf32>
    %5 = vector.extract_strided_slice %0 {offsets = [0, 1, 0], sizes = [3, 15, 16], strides = [1, 1, 1]} : vector<3x16x16xf32> to vector<3x15x16xf32>
    %6 = tpu.concatenate %5, %2 in 1 : vector<3x15x16xf32>, vector<3x1x16xf32> -> vector<3x16x16xf32>
    %7 = arith.subf %6, %4 : vector<3x16x16xf32>
    %cst_3 = arith.constant 0.000000e+00 : f32
    %8 = vector.broadcast %cst_3 : f32 to vector<3x16x1xf32>
    %9 = vector.extract_strided_slice %0 {offsets = [0, 0, 0], sizes = [3, 16, 15], strides = [1, 1, 1]} : vector<3x16x16xf32> to vector<3x16x15xf32>
    %10 = tpu.concatenate %8, %9 in 2 : vector<3x16x1xf32>, vector<3x16x15xf32> -> vector<3x16x16xf32>
    %11 = vector.extract_strided_slice %0 {offsets = [0, 0, 1], sizes = [3, 16, 15], strides = [1, 1, 1]} : vector<3x16x16xf32> to vector<3x16x15xf32>
    %12 = tpu.concatenate %11, %8 in 2 : vector<3x16x15xf32>, vector<3x16x1xf32> -> vector<3x16x16xf32>
    %13 = arith.subf %12, %10 : vector<3x16x16xf32>
    %14 = arith.mulf %7, %7 : vector<3x16x16xf32>
    %15 = arith.mulf %13, %13 : vector<3x16x16xf32>
    %16 = arith.addf %14, %15 : vector<3x16x16xf32>
    %cst_4 = arith.constant 9.99999997E-7 : f32
    %17 = vector.broadcast %cst_4 : f32 to vector<3x16x16xf32>
    %18 = arith.addf %16, %17 : vector<3x16x16xf32>
    %19 = math.sqrt %18 : vector<3x16x16xf32>
    %c0_5 = arith.constant 0 : index
    %c0_6 = arith.constant 0 : index
    %c0_7 = arith.constant 0 : index
    %20 = vector.load %arg3[%c0_5, %c0_6, %c0_7] : memref<3x16x16xf32, #tpu.memory_space<vmem>>, vector<3x16x16xf32>
    tpu.vector_store %arg3[%c0_5, %c0_6, %c0_7], %19 {strides = array<i32>} : memref<3x16x16xf32, #tpu.memory_space<vmem>>, vector<3x16x16xf32>,
    return
  }
  func.func @transform_0(%arg0: i32, %arg1: i32) -> (i32, i32, i32) {
    %c0_i32 = arith.constant 0 : i32
    %c0_i32_0 = arith.constant 0 : i32
    return %arg0, %arg1, %c0_i32 : i32, i32, i32
  }
  func.func @transform_1(%arg0: i32, %arg1: i32) -> (i32, i32, i32) {
    %c0_i32 = arith.constant 0 : i32
    %c0_i32_0 = arith.constant 0 : i32
    return %arg0, %arg1, %c0_i32 : i32, i32, i32
  }
}

</mosaic_0001>

<llo_original>
// kernel: get_gradient.1
$region0: #{get_gradient.1}
  #allocation0 [shape = 'u32[]', space=smem, size = 0x4, offset = 0x4, fixed_abs, tag = 'smem constant byte address 0x4 - core index']
  #allocation1 [shape = 'u32[144,128]{1,0:T(1,128)}', space=vmem, size = 0x12000, scoped, tag = 'internal scratch']
  %s0 = inlined_call_operand.hbm [shape: f32[6,16,16], index: 0, kind: input, shape index: {}]
  %s1 = inlined_call_operand.hbm [shape: f32[6,16,16], index: 1, kind: output, shape index: {}]
  %s2 = sld [smem:[#allocation0]]
  $region41: #{get_gradient.1} parent=0
    _
  %s4 = ssub.s32 1, %s2
  %s5 = scalar_select 0, %s4, %s2
  $region1: #{get_gradient.1} parent=0
    #allocation2 [shape = 'u8[49152]{0}', space=vmem, size = 0xc000, scoped, tag = 'input window, operand 0']
    #allocation3 [shape = 's32[2]{0}', space=sflag, size = 0x8, scoped, tag = 'scoped memory for get_gradient.1']
    #allocation4 [shape = 's32[2]{0}', space=sflag, size = 0x8, scoped, tag = 'scoped memory for get_gradient.1']
    #allocation5 [shape = 'u8[49152]{0}', space=vmem, size = 0xc000, scoped, tag = 'output window, operand 0']
    %6 = vsyncpa [#allocation3], 0
    %s7 = scalar_lea.sflag [#allocation3], 1
    %8 = vsyncpa %s7, 0
    %9 = vsyncpa [#allocation4], 0
    %s10 = scalar_lea.sflag [#allocation4], 1
    %11 = vsyncpa %s10, 0
    loop: start=0, step=1, limit=4
    $region2: #{get_gradient.1} parent=1 // loop_pre_header
      _
    $region3: #{get_gradient.1} parent=1 // loop_header
      %s13 = sphi 0, %s17
      %p14 = scmp.ge.s32.totalorder %s13, 4
      %s20 = sphi 0, %s32
      %s21 = sphi 0, %s28
      %s22 = sphi 0, %s20
      %s23 = sphi 0, %s21
      %s24 = sphi 0, %s22
      %s25 = sphi 0, %s23
      %s37 = sphi 0, %s39
      %s40 = sphi 0, %s37
      %s41 = sphi 0, %s40
      %s57 = sphi 0, %s41
      %s65 = sphi 0, %s67
      %s68 = sphi 0, %s65
      %s69 = sphi 0, %s68
      %s85 = sphi 0, %s69
    $region4: #{get_gradient.1} parent=1 // loop_header_branch
      %16 = sbr.rel (%p14) target = $region8
    $region5: #{get_gradient.1} parent=1 // loop_body
      %s18 = ssub.s32 %s13, 1
      %s19 = ssub.s32 %s13, 2
      %s26 = sadd.s32 1, %s21
      %p27 = scmp.ge.s32.totalorder %s26, 1
      %s28 = scalar_select %p27, 0, %s26
      %s29 = sadd.s32 1, %s20
      %s30 = scalar_select %p27, %s29, %s20
      %p31 = scmp.ge.s32.totalorder %s30, 2
      %s32 = scalar_select %p31, 0, %s30
      %s33 = ssub.s32 %s20, %s32
      %s34 = ssub.s32 %s21, %s28
      %s35 = sor.u32 %s33, %s34
      %p36 = scmp.eq.s32.totalorder %s35, 0
      %s38 = sadd.s32 %s37, 1
      %s39 = scalar_select %p36, %s37, %s38
      %p42 = pneg %p36
      %p43 = scmp.eq.s32.totalorder %s13, 1
      %p44 = por %p42, %p43
      %p45 = scmp.ne.s32.totalorder %s37, %s40
      %p46 = scmp.eq.s32.totalorder %s13, 0
      %p47 = por %p45, %p46
      %p48 = scmp.ne.s32.totalorder %s37, %s40
      %p49 = scmp.eq.s32.totalorder %s18, 1
      %p50 = por %p48, %p49
      %p51 = scmp.ne.s32.totalorder %s40, %s41
      %p52 = scmp.eq.s32.totalorder %s18, 0
      %p53 = por %p51, %p52
      %p54 = scmp.ne.s32.totalorder %s40, %s41
      %p55 = scmp.eq.s32.totalorder %s19, 1
      %p56 = por %p54, %p55
      %p58 = scmp.ne.s32.totalorder %s41, %s57
      %p59 = scmp.eq.s32.totalorder %s19, 0
      %p60 = por %p58, %p59
      %s61 = ssub.s32 %s20, %s32
      %s62 = ssub.s32 %s21, %s28
      %s63 = sor.u32 %s61, %s62
      %p64 = scmp.eq.s32.totalorder %s63, 0
      %s66 = sadd.s32 %s65, 1
      %s67 = scalar_select %p64, %s65, %s66
      %p70 = pneg %p64
      %p71 = scmp.eq.s32.totalorder %s13, 1
      %p72 = por %p70, %p71
      %p73 = scmp.ne.s32.totalorder %s65, %s68
      %p74 = scmp.eq.s32.totalorder %s13, 0
      %p75 = por %p73, %p74
      %p76 = scmp.ne.s32.totalorder %s65, %s68
      %p77 = scmp.eq.s32.totalorder %s18, 1
      %p78 = por %p76, %p77
      %p79 = scmp.ne.s32.totalorder %s68, %s69
      %p80 = scmp.eq.s32.totalorder %s18, 0
      %p81 = por %p79, %p80
      %p82 = scmp.ne.s32.totalorder %s68, %s69
      %p83 = scmp.eq.s32.totalorder %s19, 1
      %p84 = por %p82, %p83
      %p86 = scmp.ne.s32.totalorder %s69, %s85
      %p87 = scmp.eq.s32.totalorder %s19, 0
      %p88 = por %p86, %p87
      %p89 = scmp.le.s32.totalorder 1, %s13
      %p90 = scmp.lt.s32.totalorder %s13, 3
      %p91 = pnand %p89, %p90
      %p92 = pneg %p91
      // Predicated region
      $region9: #{get_gradient.1} parent=5 // pred_check
        _
      $region10: #{get_gradient.1} parent=5 // pred_check_branch
        %94 = sbr.rel (%p91) target = $region12
      $region11: #{get_gradient.1} parent=5 // pred_region
        %s95 = ssub.s32 %s13, 1
      $region12: #{get_gradient.1} parent=5 // pred_fallthru
        _
      %p96 = scmp.lt.s32.totalorder %s13, 2
      // Predicated region
      $region13: #{get_gradient.1} parent=5 // pred_check
        %p97 = pneg %p96
      $region14: #{get_gradient.1} parent=5 // pred_check_branch
        %99 = sbr.rel (%p97) target = $region16
      $region15: #{get_gradient.1} parent=5 // pred_region
        // Predicated region
        $region17: #{get_gradient.1} parent=15 // pred_check
          %p100 = pneg %p47
        $region18: #{get_gradient.1} parent=15 // pred_check_branch
          %102 = sbr.rel (%p100) target = $region20
        $region19: #{get_gradient.1} parent=15 // pred_region
          %s103 = sand.u32 %s37, 1
          %s104 = scalar_lea.sflag [#allocation3], %s103
          %s105 = sand.u32 %s37, 1
          %s106 = smul.addr %s105, 48
          %s107 = scalar_lea.vmem [#allocation2], %s106
          %s108 = smul.u32 3, %s20
          %s109 = smul.u32 2, %s21
          %s111 = ssub.s32 768, 768
          %112 = vsyncadd %s104, %s111
          %s113 = smul.addr %s108, 2
          %s114 = sadd.s32 %s109, %s113
          %s115 = smul.addr %s114, 128
          %s116 = scalar_lea.hbm %s0, %s115
          %s117 = sshll.u32 %s107, 4
          %s118 = int_to_ptr.vmem [resolvable:$true] %s117
          %123 = dma.hbm_to_vmem [thread:$0]  %s116, 768, %s118, %s104, 128, 128, 8
        $region20: #{get_gradient.1} parent=15 // pred_fallthru
          _
      $region16: #{get_gradient.1} parent=5 // pred_fallthru
        _
      %p124 = scmp.le.s32.totalorder 1, %s13
      %p125 = scmp.lt.s32.totalorder %s13, 3
      %p126 = pnand %p124, %p125
      %p127 = pneg %p126
      // Predicated region
      $region21: #{get_gradient.1} parent=5 // pred_check
        _
      $region22: #{get_gradient.1} parent=5 // pred_check_branch
        %129 = sbr.rel (%p126) target = $region24
      $region23: #{get_gradient.1} parent=5 // pred_region
        %s130 = ssub.s32 %s13, 1
        %s131 = sand.u32 %s40, 1
        %s132 = scalar_lea.sflag [#allocation3], %s131
        %s133 = sand.u32 %s40, 1
        %s134 = smul.addr %s133, 48
        %s135 = scalar_lea.vmem [#allocation2], %s134
        // Predicated region
        $region25: #{get_gradient.1} parent=23 // pred_check
          %p136 = pneg %p53
        $region26: #{get_gradient.1} parent=23 // pred_check_branch
          %138 = sbr.rel (%p136) target = $region28
        $region27: #{get_gradient.1} parent=23 // pred_region
          %139 = dma.done %s132, 768
        $region28: #{get_gradient.1} parent=23 // pred_fallthru
          _
        %s140 = sand.u32 %s40, 1
        %s141 = scalar_lea.sflag [#allocation3], %s140
        %s142 = sand.u32 %s40, 1
        %s143 = smul.addr %s142, 48
        %s144 = scalar_lea.vmem [#allocation2], %s143
        %p145 = pneg %p53
        %p146 = pneg %p50
        %p147 = pneg %p81
        %p148 = pneg %p78
        %s149 = sand.u32 %s68, 1
        %s150 = scalar_lea.sflag [#allocation4], %s149
        %s151 = sand.u32 %s68, 1
        %s152 = smul.addr %s151, 48
        %s153 = scalar_lea.vmem [#allocation5], %s152
        %s154 = smul.u32 3, %s22
        %s155 = smul.u32 2, %s23
        %s156 = smul.u32 3, %s22
        %s157 = smul.u32 2, %s23
        %v158 = vld [vmem:[%s135] sm:$0xff]
        %v159 = vld [vmem:[%s135 + $0x8] sm:$0xff]
        %v160 = vld [vmem:[%s135 + $0x10] sm:$0xff]
        %v161 = vld [vmem:[%s135 + $0x18] sm:$0xff]
        %v162 = vld [vmem:[%s135 + $0x20] sm:$0xff]
        %v163 = vld [vmem:[%s135 + $0x28] sm:$0xff]
        %vm170 = vcmask 1040384
        %v171 = vrot.slane %v158, 7
        %v172 = vrot.slane %v159, 7
        %v173 = vsel %vm170, %v171, %v172
        %v174 = vrot.slane %v160, 7
        %v175 = vrot.slane %v161, 7
        %v176 = vsel %vm170, %v174, %v175
        %v177 = vrot.slane %v162, 7
        %v178 = vrot.slane %v163, 7
        %v179 = vsel %vm170, %v177, %v178
        %v186 = vsel %vm170, 0.0, %v171
        %v187 = vsel %vm170, 0.0, %v174
        %v188 = vsel %vm170, 0.0, %v177
        %vm189 = vcmask 1046528
        %v190 = vrot.slane %v158, 1
        %v191 = vrot.slane %v159, 1
        %v192 = vsel %vm189, %v190, %v191
        %v193 = vrot.slane %v160, 1
        %v194 = vrot.slane %v161, 1
        %v195 = vsel %vm189, %v193, %v194
        %v196 = vrot.slane %v162, 1
        %v197 = vrot.slane %v163, 1
        %v198 = vsel %vm189, %v196, %v197
        %v205 = vsel %vm189, %v191, 0.0
        %v206 = vsel %vm189, %v194, 0.0
        %v207 = vsel %vm189, %v197, 0.0
        %v208 = vsub.f32 %v192, %v186
        %v209 = vsub.f32 %v205, %v173
        %v210 = vsub.f32 %v195, %v187
        %v211 = vsub.f32 %v206, %v176
        %v212 = vsub.f32 %v198, %v188
        %v213 = vsub.f32 %v207, %v179
        %214 = vrot.lane.b32.xlu0 %v158, 1
        %v215 = vpop.permute.xlu0 %214
        %216 = vrot.lane.b32.xlu0 %v159, 1
        %v217 = vpop.permute.xlu0 %216
        %218 = vrot.lane.b32.xlu0 %v160, 1
        %v219 = vpop.permute.xlu0 %218
        %220 = vrot.lane.b32.xlu0 %v161, 1
        %v221 = vpop.permute.xlu0 %220
        %222 = vrot.lane.b32.xlu0 %v162, 1
        %v223 = vpop.permute.xlu0 %222
        %224 = vrot.lane.b32.xlu0 %v163, 1
        %v225 = vpop.permute.xlu0 %224
        %vm232 = vcmask 7168
        %v233 = vsel %vm232, 0.0, %v215
        %v234 = vsel %vm232, 0.0, %v217
        %v235 = vsel %vm232, 0.0, %v219
        %v236 = vsel %vm232, 0.0, %v221
        %v237 = vsel %vm232, 0.0, %v223
        %v238 = vsel %vm232, 0.0, %v225
        %239 = vrot.lane.b32.xlu0 %v158, 127
        %v240 = vpop.permute.xlu0 %239
        %241 = vrot.lane.b32.xlu0 %v159, 127
        %v242 = vpop.permute.xlu0 %241
        %243 = vrot.lane.b32.xlu0 %v160, 127
        %v244 = vpop.permute.xlu0 %243
        %245 = vrot.lane.b32.xlu0 %v161, 127
        %v246 = vpop.permute.xlu0 %245
        %247 = vrot.lane.b32.xlu0 %v162, 127
        %v248 = vpop.permute.xlu0 %247
        %249 = vrot.lane.b32.xlu0 %v163, 127
        %v250 = vpop.permute.xlu0 %249
        %vm257 = vcmask 121856
        %v258 = vsel %vm257, %v240, 0.0
        %v259 = vsel %vm257, %v242, 0.0
        %v260 = vsel %vm257, %v244, 0.0
        %v261 = vsel %vm257, %v246, 0.0
        %v262 = vsel %vm257, %v248, 0.0
        %v263 = vsel %vm257, %v250, 0.0
        %v264 = vsub.f32 %v258, %v233
        %v265 = vsub.f32 %v259, %v234
        %v266 = vsub.f32 %v260, %v235
        %v267 = vsub.f32 %v261, %v236
        %v268 = vsub.f32 %v262, %v237
        %v269 = vsub.f32 %v263, %v238
        %v270 = vmul.f32 %v208, %v208
        %v271 = vmul.f32 %v209, %v209
        %v272 = vmul.f32 %v210, %v210
        %v273 = vmul.f32 %v211, %v211
        %v274 = vmul.f32 %v212, %v212
        %v275 = vmul.f32 %v213, %v213
        %v276 = vmul.f32 %v264, %v264
        %v277 = vmul.f32 %v265, %v265
        %v278 = vmul.f32 %v266, %v266
        %v279 = vmul.f32 %v267, %v267
        %v280 = vmul.f32 %v268, %v268
        %v281 = vmul.f32 %v269, %v269
        %v282 = vadd.f32 %v270, %v276
        %v283 = vadd.f32 %v271, %v277
        %v284 = vadd.f32 %v272, %v278
        %v285 = vadd.f32 %v273, %v279
        %v286 = vadd.f32 %v274, %v280
        %v287 = vadd.f32 %v275, %v281
        %v288 = vadd.f32 %v282, 1e-06
        %v289 = vadd.f32 %v283, 1e-06
        %v290 = vadd.f32 %v284, 1e-06
        %v291 = vadd.f32 %v285, 1e-06
        %v292 = vadd.f32 %v286, 1e-06
        %v293 = vadd.f32 %v287, 1e-06
        %v294 = vrsqrt.pop %v288
        %v295 = vmul.f32 %v288, %v294
        %vm296 = vcmp.eq.f32.partialorder %v288, inf
        %v297 = vsel %vm296, %v288, %v295
        %vm298 = vcmp.eq.f32.partialorder %v288, 0.0
        %v299 = vand.u32 %v288, 2147483648
        %v300 = vsel %vm298, %v299, %v297
        %v301 = vrsqrt.pop %v289
        %v302 = vmul.f32 %v289, %v301
        %vm303 = vcmp.eq.f32.partialorder %v289, inf
        %v304 = vsel %vm303, %v289, %v302
        %vm305 = vcmp.eq.f32.partialorder %v289, 0.0
        %v306 = vand.u32 %v289, 2147483648
        %v307 = vsel %vm305, %v306, %v304
        %v308 = vrsqrt.pop %v290
        %v309 = vmul.f32 %v290, %v308
        %vm310 = vcmp.eq.f32.partialorder %v290, inf
        %v311 = vsel %vm310, %v290, %v309
        %vm312 = vcmp.eq.f32.partialorder %v290, 0.0
        %v313 = vand.u32 %v290, 2147483648
        %v314 = vsel %vm312, %v313, %v311
        %v315 = vrsqrt.pop %v291
        %v316 = vmul.f32 %v291, %v315
        %vm317 = vcmp.eq.f32.partialorder %v291, inf
        %v318 = vsel %vm317, %v291, %v316
        %vm319 = vcmp.eq.f32.partialorder %v291, 0.0
        %v320 = vand.u32 %v291, 2147483648
        %v321 = vsel %vm319, %v320, %v318
        %v322 = vrsqrt.pop %v292
        %v323 = vmul.f32 %v292, %v322
        %vm324 = vcmp.eq.f32.partialorder %v292, inf
        %v325 = vsel %vm324, %v292, %v323
        %vm326 = vcmp.eq.f32.partialorder %v292, 0.0
        %v327 = vand.u32 %v292, 2147483648
        %v328 = vsel %vm326, %v327, %v325
        %v329 = vrsqrt.pop %v293
        %v330 = vmul.f32 %v293, %v329
        %vm331 = vcmp.eq.f32.partialorder %v293, inf
        %v332 = vsel %vm331, %v293, %v330
        %vm333 = vcmp.eq.f32.partialorder %v293, 0.0
        %v334 = vand.u32 %v293, 2147483648
        %v335 = vsel %vm333, %v334, %v332
        %vm336 = vcmask 130048
        %337 = vst.msk [vmem:[%s153] sm:$0xff] %vm336, %v300
        %338 = vst.msk [vmem:[%s153 + $0x8] sm:$0xff] %vm336, %v307
        %339 = vst.msk [vmem:[%s153 + $0x10] sm:$0xff] %vm336, %v314
        %340 = vst.msk [vmem:[%s153 + $0x18] sm:$0xff] %vm336, %v321
        %341 = vst.msk [vmem:[%s153 + $0x20] sm:$0xff] %vm336, %v328
        %342 = vst.msk [vmem:[%s153 + $0x28] sm:$0xff] %vm336, %v335
        %s343 = sand.u32 %s68, 1
        %s344 = scalar_lea.sflag [#allocation4], %s343
        %s345 = sand.u32 %s68, 1
        %s346 = smul.addr %s345, 48
        %s347 = scalar_lea.vmem [#allocation5], %s346
        // Predicated region
        $region29: #{get_gradient.1} parent=23 // pred_check
          %p348 = pneg %p78
        $region30: #{get_gradient.1} parent=23 // pred_check_branch
          %350 = sbr.rel (%p348) target = $region32
        $region31: #{get_gradient.1} parent=23 // pred_region
          %s351 = smul.u32 3, %s22
          %s352 = smul.u32 2, %s23
          %s354 = ssub.s32 768, 768
          %355 = vsyncadd %s344, %s354
          %s356 = smul.addr %s351, 2
          %s357 = sadd.s32 %s352, %s356
          %s358 = smul.addr %s357, 128
          %s359 = scalar_lea.hbm %s1, %s358
          %s360 = sshll.u32 %s347, 4
          %s361 = int_to_ptr.vmem [resolvable:$true] %s360
          %366 = dma.vmem_to_hbm [thread:$0]  %s361, 768, %s359, %s344, 128, 128, 8
        $region32: #{get_gradient.1} parent=23 // pred_fallthru
          _
      $region24: #{get_gradient.1} parent=5 // pred_fallthru
        _
      %p367 = scmp.le.s32.totalorder 2, %s13
      // Predicated region
      $region33: #{get_gradient.1} parent=5 // pred_check
        %p368 = pneg %p367
      $region34: #{get_gradient.1} parent=5 // pred_check_branch
        %370 = sbr.rel (%p368) target = $region36
      $region35: #{get_gradient.1} parent=5 // pred_region
        %s371 = ssub.s32 %s13, 2
        // Predicated region
        $region37: #{get_gradient.1} parent=35 // pred_check
          %p372 = pneg %p84
        $region38: #{get_gradient.1} parent=35 // pred_check_branch
          %374 = sbr.rel (%p372) target = $region40
        $region39: #{get_gradient.1} parent=35 // pred_region
          %s375 = sand.u32 %s69, 1
          %s376 = scalar_lea.sflag [#allocation4], %s375
          %s377 = sand.u32 %s69, 1
          %s378 = smul.addr %s377, 48
          %s379 = scalar_lea.vmem [#allocation5], %s378
          %380 = dma.done %s376, 768
        $region40: #{get_gradient.1} parent=35 // pred_fallthru
          _
      $region36: #{get_gradient.1} parent=5 // pred_fallthru
        _
    $region6: #{get_gradient.1} parent=1 // loop_footer
      %s17 = sadd.s32 1, %s13
    $region7: #{get_gradient.1} parent=1 // loop_footer_branch
      %12 = sbr.rel target = $region3
    $region8: #{get_gradient.1} parent=1 // loop_exit
      _
    %381 = vsyncpa [#allocation3], 1
    %s382 = scalar_lea.sflag [#allocation3], 1
    %383 = vsyncpa %s382, 1
    %384 = vsyncpa [#allocation4], 1
    %s385 = scalar_lea.sflag [#allocation4], 1
    %386 = vsyncpa %s385, 1

</llo_original>
